<compile_context>
chip_gen: v7x
topology: tpu7x:2x2x1
jax: 0.10.0
libtpu: 0.0.40
codegen_flags: <defaults>
</compile_context>

<pallas_src>
import math

import jax
import jax.numpy as jnp
from jax.experimental import pallas as pl
from jax.experimental.pallas import tpu as pltpu

# ---- module hyperparameters (small, consistent with the module) ------------
BATCH = 2
SEQ = 8
HEADS = 2
DIM_HEAD = 64
DIM = HEADS * DIM_HEAD          # d_model = 128  (project_out = True)
INNER_DIM = HEADS * DIM_HEAD    # 128
SCALE = DIM_HEAD ** -0.5
HEAD_PAD = 128                  # each head's q/k/v block padded to a full lane tile


def attention_kernel(x_ref, wqkv_ref, wo_ref, bo_ref, o_ref):
    """x_ref: (B, N, D) f32; wqkv_ref: (D, 3*H*128) bf16, head-padded, SCALE folded
    into the q blocks; wo_ref: (H*128, D) bf16 with zero rows on padded lanes;
    bo_ref: (1, D) f32; o_ref: (B, N, D)."""
    B, N, D = x_ref.shape
    BN = B * N

    # Fused QKV projection: one wide bf16 MXU matmul, f32 accumulation.
    x = x_ref[...].reshape(BN, D).astype(jnp.bfloat16)          # (16, 128)
    qkv = jnp.dot(x, wqkv_ref[...],
                  preferred_element_type=jnp.float32)           # (16, 3*H*128) f32
    qkv_bf = qkv.astype(jnp.bfloat16)                           # bf16 operands for MXU

    batch_outs = []
    for b in range(B):                                          # static, unrolled
        r0 = b * N
        head_outs = []
        for h in range(HEADS):                                  # static, unrolled
            qc = h * HEAD_PAD                                   # 128-lane aligned
            kc = (HEADS + h) * HEAD_PAD
            vc = (2 * HEADS + h) * HEAD_PAD
            qh = qkv_bf[r0:r0 + N, qc:qc + HEAD_PAD]            # (N, 128), lanes 64: are 0
            kh = qkv_bf[r0:r0 + N, kc:kc + HEAD_PAD]
            vh = qkv_bf[r0:r0 + N, vc:vc + HEAD_PAD]

            # scores: contract the (padded) head dim directly; SCALE already folded in.
            s = jax.lax.dot_general(
                qh, kh, dimension_numbers=(((1,), (1,)), ((), ())),
                preferred_element_type=jnp.float32)             # (N, N) f32
            s = s - jnp.max(s, axis=-1, keepdims=True)          # stable softmax
            p = jnp.exp(s)
            p = p * pl.reciprocal(jnp.sum(p, axis=-1, keepdims=True), approx=False)

            oh = jnp.dot(p.astype(jnp.bfloat16), vh,
                         preferred_element_type=jnp.float32)    # (N, 128), lanes 64: are 0
            head_outs.append(oh)
        batch_outs.append(jnp.concatenate(head_outs, axis=1))   # (N, H*128), aligned concat

    # One fused output projection for all batches/heads + one bias add + one store.
    O = jnp.concatenate(batch_outs, axis=0).astype(jnp.bfloat16)        # (BN, H*128)
    out = jnp.dot(O, wo_ref[...], preferred_element_type=jnp.float32)   # (BN, D)
    o_ref[...] = (out + bo_ref[...]).reshape(B, N, D).astype(o_ref.dtype)


def prepare_params(params):
    """One-time layout transform of PyTorch-convention weights into kernel layout.
    Done once at init / load time, NOT in the per-call forward path."""
    wqkv_t = jnp.asarray(params["w_qkv"], jnp.float32).T        # (DIM, 3*INNER_DIM)
    wo_t = jnp.asarray(params["w_out"], jnp.float32).T          # (INNER_DIM, DIM)
    b_out = jnp.asarray(params["b_out"], jnp.float32)           # (1, DIM)

    # Head-padded QKV weight: columns [q_h0 | q_h1 | k_h0 | k_h1 | v_h0 | v_h1],
    # each block HEAD_PAD lanes wide (real weights in the first DIM_HEAD lanes).
    wqkv_pad = jnp.zeros((DIM, 3 * HEADS * HEAD_PAD), jnp.float32)
    for which in range(3):                                      # 0=q, 1=k, 2=v
        for h in range(HEADS):
            src = wqkv_t[:, which * INNER_DIM + h * DIM_HEAD:
                            which * INNER_DIM + (h + 1) * DIM_HEAD]
            if which == 0:
                src = src * SCALE                               # fold softmax scale into q
            dst = (which * HEADS + h) * HEAD_PAD
            wqkv_pad = wqkv_pad.at[:, dst:dst + DIM_HEAD].set(src)

    # Output-projection weight padded to match the head-padded lane layout.
    wo_pad = jnp.zeros((HEADS * HEAD_PAD, DIM), jnp.float32)
    for h in range(HEADS):
        wo_pad = wo_pad.at[h * HEAD_PAD:h * HEAD_PAD + DIM_HEAD, :].set(
            wo_t[h * DIM_HEAD:(h + 1) * DIM_HEAD, :])

    return dict(
        wqkv=wqkv_pad.astype(jnp.bfloat16),                     # (128, 768) bf16
        wo=wo_pad.astype(jnp.bfloat16),                         # (256, 128) bf16
        b_out=b_out,                                            # (1, 128)  f32
    )


@jax.jit
def attention_forward(x, kparams):
    """x: (B, N, D) float32. kparams: output of prepare_params (kernel layout)."""
    B, N, D = x.shape
    vmem = pl.BlockSpec(memory_space=pltpu.MemorySpace.VMEM)

    qkv_cols = kparams["wqkv"].shape[1]
    flops = (2 * B * N * D * qkv_cols                       # QKV projection
             + 2 * (2 * B * HEADS * N * N * HEAD_PAD)       # scores + PV
             + 2 * B * N * HEADS * HEAD_PAD * D)            # output projection
    bytes_accessed = (x.size * 4
                      + kparams["wqkv"].size * 2
                      + kparams["wo"].size * 2
                      + kparams["b_out"].size * 4
                      + B * N * D * 4)

    return pl.pallas_call(
        attention_kernel,
        out_shape=jax.ShapeDtypeStruct((B, N, D), x.dtype),
        in_specs=[vmem, vmem, vmem, vmem],
        out_specs=vmem,
        cost_estimate=pl.CostEstimate(flops=int(flops),
                                      transcendentals=int(B * HEADS * N * N),
                                      bytes_accessed=int(bytes_accessed)),
    )(x, kparams["wqkv"], kparams["wo"], kparams["b_out"])


def reference_forward(x, params):
    """Plain-JAX f32 replica of the PyTorch forward (eval mode, dropout=0)."""
    B, N, D = x.shape
    qkv = x @ params["w_qkv"].T                                   # (B, N, 3*ID)
    q, k, v = jnp.split(qkv, 3, axis=-1)

    def split_heads(t):
        return t.reshape(B, N, HEADS, DIM_HEAD).transpose(0, 2, 1, 3)

    q, k, v = split_heads(q), split_heads(k), split_heads(v)
    dots = jnp.einsum("bhqd,bhkd->bhqk", q, k) * SCALE
    attn = jax.nn.softmax(dots, axis=-1)
    out = jnp.einsum("bhqk,bhkd->bhqd", attn, v)
    out = out.transpose(0, 2, 1, 3).reshape(B, N, INNER_DIM)
    return out @ params["w_out"].T + params["b_out"]


def init_params(key):
    """PyTorch-convention (out, in) weights, as nn.Linear default init would give."""
    k1, k2, k3 = jax.random.split(key, 3)

    def uni(k, shape, fan_in):
        bound = 1.0 / math.sqrt(fan_in)
        return jax.random.uniform(k, shape, jnp.float32, -bound, bound)

    return dict(
        w_qkv=uni(k1, (3 * INNER_DIM, DIM), DIM),      # to_qkv weight (no bias)
        w_out=uni(k2, (DIM, INNER_DIM), INNER_DIM),    # to_out Linear weight
        b_out=uni(k3, (1, DIM), INNER_DIM),            # to_out Linear bias
    )


if __name__ == "__main__":
    key = jax.random.PRNGKey(0)
    kx, kp = jax.random.split(key)
    x = jax.random.normal(kx, (BATCH, SEQ, DIM), jnp.float32)
    params = init_params(kp)

    kparams = jax.block_until_ready(prepare_params(params))     # one-time weight prep

    out = jax.block_until_ready(attention_forward(x, kparams))
    ref = reference_forward(x, params)

    assert out.shape == (BATCH, SEQ, DIM)
    # bf16 MXU operands (f32 accumulation) vs the f32 reference -> relaxed tolerance.
    assert jnp.allclose(out, ref, atol=2e-2, rtol=2e-2), "mismatch vs JAX reference"

    print("KERNEL_OK")
</pallas_src>

<mosaic_0001>
module attributes {stable_mosaic.version = 11 : i64} {
  func.func @attention_kernel(%arg0: memref<2x8x128xf32, #tpu.memory_space<vmem>>, %arg1: memref<128x768xbf16, #tpu.memory_space<vmem>>, %arg2: memref<256x128xbf16, #tpu.memory_space<vmem>>, %arg3: memref<1x128xf32, #tpu.memory_space<vmem>>, %arg4: memref<2x8x128xf32, #tpu.memory_space<vmem>>) attributes {dimension_semantics = [], scalar_prefetch = 0 : i64, scratch_operands = 0 : i64, tpu.core_type = #tpu.core_type<tc>} {
    %c0 = arith.constant 0 : index
    %c0_0 = arith.constant 0 : index
    %c0_1 = arith.constant 0 : index
    %0 = vector.load %arg0[%c0, %c0_0, %c0_1] : memref<2x8x128xf32, #tpu.memory_space<vmem>>, vector<2x8x128xf32>
    %1 = vector.shape_cast %0 : vector<2x8x128xf32> to vector<16x128xf32>
    %2 = arith.truncf %1 : vector<16x128xf32> to vector<16x128xbf16>
    %c0_2 = arith.constant 0 : index
    %c0_3 = arith.constant 0 : index
    %3 = vector.load %arg1[%c0_2, %c0_3] : memref<128x768xbf16, #tpu.memory_space<vmem>>, vector<128x768xbf16>
    %cst = arith.constant dense<0.000000e+00> : vector<16x768xf32>
    %4 = tpu.matmul %2, %3, %cst {dimension_numbers = #tpu.dot_dimension_numbers<[1], [0], [0], [1], [0, 0, 1, 1], [], []>} : vector<16x128xbf16>, vector<128x768xbf16>, vector<16x768xf32> -> vector<16x768xf32>
    %5 = arith.truncf %4 : vector<16x768xf32> to vector<16x768xbf16>
    %6 = vector.extract_strided_slice %5 {offsets = [0, 0], sizes = [8, 128], strides = [1, 1]} : vector<16x768xbf16> to vector<8x128xbf16>
    %7 = vector.extract_strided_slice %5 {offsets = [0, 256], sizes = [8, 128], strides = [1, 1]} : vector<16x768xbf16> to vector<8x128xbf16>
    %8 = vector.extract_strided_slice %5 {offsets = [0, 512], sizes = [8, 128], strides = [1, 1]} : vector<16x768xbf16> to vector<8x128xbf16>
    %cst_4 = arith.constant dense<0.000000e+00> : vector<8x8xf32>
    %9 = tpu.matmul %6, %7, %cst_4 {dimension_numbers = #tpu.dot_dimension_numbers<[1], [1], [0], [0], [0, 0, 1, 0], [], []>} : vector<8x128xbf16>, vector<8x128xbf16>, vector<8x8xf32> -> vector<8x8xf32>
    %cst_5 = arith.constant dense<0xFF800000> : vector<8xf32>
    %10 = vector.multi_reduction <maximumf>, %9, %cst_5 [1] : vector<8x8xf32> to vector<8xf32>
    %11 = vector.shape_cast %10 : vector<8xf32> to vector<8x1xf32>
    %12 = vector.broadcast %11 : vector<8x1xf32> to vector<8x8xf32>
    %13 = arith.subf %9, %12 : vector<8x8xf32>
    %14 = math.exp %13 : vector<8x8xf32>
    %cst_6 = arith.constant dense<0.000000e+00> : vector<8xf32>
    %15 = vector.multi_reduction <add>, %14, %cst_6 [1] : vector<8x8xf32> to vector<8xf32>
    %16 = vector.shape_cast %15 : vector<8xf32> to vector<8x1xf32>
    %17 = tpu.reciprocal %16 : vector<8x1xf32> -> vector<8x1xf32>
    %18 = vector.broadcast %17 : vector<8x1xf32> to vector<8x8xf32>
    %19 = arith.mulf %14, %18 : vector<8x8xf32>
    %20 = arith.truncf %19 : vector<8x8xf32> to vector<8x8xbf16>
    %cst_7 = arith.constant dense<0.000000e+00> : vector<8x128xf32>
    %21 = tpu.matmul %20, %8, %cst_7 {dimension_numbers = #tpu.dot_dimension_numbers<[1], [0], [0], [1], [0, 0, 1, 1], [], []>} : vector<8x8xbf16>, vector<8x128xbf16>, vector<8x128xf32> -> vector<8x128xf32>
    %22 = vector.extract_strided_slice %5 {offsets = [0, 128], sizes = [8, 128], strides = [1, 1]} : vector<16x768xbf16> to vector<8x128xbf16>
    %23 = vector.extract_strided_slice %5 {offsets = [0, 384], sizes = [8, 128], strides = [1, 1]} : vector<16x768xbf16> to vector<8x128xbf16>
    %24 = vector.extract_strided_slice %5 {offsets = [0, 640], sizes = [8, 128], strides = [1, 1]} : vector<16x768xbf16> to vector<8x128xbf16>
    %cst_8 = arith.constant dense<0.000000e+00> : vector<8x8xf32>
    %25 = tpu.matmul %22, %23, %cst_8 {dimension_numbers = #tpu.dot_dimension_numbers<[1], [1], [0], [0], [0, 0, 1, 0], [], []>} : vector<8x128xbf16>, vector<8x128xbf16>, vector<8x8xf32> -> vector<8x8xf32>
    %cst_9 = arith.constant dense<0xFF800000> : vector<8xf32>
    %26 = vector.multi_reduction <maximumf>, %25, %cst_9 [1] : vector<8x8xf32> to vector<8xf32>
    %27 = vector.shape_cast %26 : vector<8xf32> to vector<8x1xf32>
    %28 = vector.broadcast %27 : vector<8x1xf32> to vector<8x8xf32>
    %29 = arith.subf %25, %28 : vector<8x8xf32>
    %30 = math.exp %29 : vector<8x8xf32>
    %cst_10 = arith.constant dense<0.000000e+00> : vector<8xf32>
    %31 = vector.multi_reduction <add>, %30, %cst_10 [1] : vector<8x8xf32> to vector<8xf32>
    %32 = vector.shape_cast %31 : vector<8xf32> to vector<8x1xf32>
    %33 = tpu.reciprocal %32 : vector<8x1xf32> -> vector<8x1xf32>
    %34 = vector.broadcast %33 : vector<8x1xf32> to vector<8x8xf32>
    %35 = arith.mulf %30, %34 : vector<8x8xf32>
    %36 = arith.truncf %35 : vector<8x8xf32> to vector<8x8xbf16>
    %cst_11 = arith.constant dense<0.000000e+00> : vector<8x128xf32>
    %37 = tpu.matmul %36, %24, %cst_11 {dimension_numbers = #tpu.dot_dimension_numbers<[1], [0], [0], [1], [0, 0, 1, 1], [], []>} : vector<8x8xbf16>, vector<8x128xbf16>, vector<8x128xf32> -> vector<8x128xf32>
    %38 = tpu.concatenate %21, %37 in 1 : vector<8x128xf32>, vector<8x128xf32> -> vector<8x256xf32>
    %39 = vector.extract_strided_slice %5 {offsets = [8, 0], sizes = [8, 128], strides = [1, 1]} : vector<16x768xbf16> to vector<8x128xbf16>
    %40 = vector.extract_strided_slice %5 {offsets = [8, 256], sizes = [8, 128], strides = [1, 1]} : vector<16x768xbf16> to vector<8x128xbf16>
    %41 = vector.extract_strided_slice %5 {offsets = [8, 512], sizes = [8, 128], strides = [1, 1]} : vector<16x768xbf16> to vector<8x128xbf16>
    %cst_12 = arith.constant dense<0.000000e+00> : vector<8x8xf32>
    %42 = tpu.matmul %39, %40, %cst_12 {dimension_numbers = #tpu.dot_dimension_numbers<[1], [1], [0], [0], [0, 0, 1, 0], [], []>} : vector<8x128xbf16>, vector<8x128xbf16>, vector<8x8xf32> -> vector<8x8xf32>
    %cst_13 = arith.constant dense<0xFF800000> : vector<8xf32>
    %43 = vector.multi_reduction <maximumf>, %42, %cst_13 [1] : vector<8x8xf32> to vector<8xf32>
    %44 = vector.shape_cast %43 : vector<8xf32> to vector<8x1xf32>
    %45 = vector.broadcast %44 : vector<8x1xf32> to vector<8x8xf32>
    %46 = arith.subf %42, %45 : vector<8x8xf32>
    %47 = math.exp %46 : vector<8x8xf32>
    %cst_14 = arith.constant dense<0.000000e+00> : vector<8xf32>
    %48 = vector.multi_reduction <add>, %47, %cst_14 [1] : vector<8x8xf32> to vector<8xf32>
    %49 = vector.shape_cast %48 : vector<8xf32> to vector<8x1xf32>
    %50 = tpu.reciprocal %49 : vector<8x1xf32> -> vector<8x1xf32>
    %51 = vector.broadcast %50 : vector<8x1xf32> to vector<8x8xf32>
    %52 = arith.mulf %47, %51 : vector<8x8xf32>
    %53 = arith.truncf %52 : vector<8x8xf32> to vector<8x8xbf16>
    %cst_15 = arith.constant dense<0.000000e+00> : vector<8x128xf32>
    %54 = tpu.matmul %53, %41, %cst_15 {dimension_numbers = #tpu.dot_dimension_numbers<[1], [0], [0], [1], [0, 0, 1, 1], [], []>} : vector<8x8xbf16>, vector<8x128xbf16>, vector<8x128xf32> -> vector<8x128xf32>
    %55 = vector.extract_strided_slice %5 {offsets = [8, 128], sizes = [8, 128], strides = [1, 1]} : vector<16x768xbf16> to vector<8x128xbf16>
    %56 = vector.extract_strided_slice %5 {offsets = [8, 384], sizes = [8, 128], strides = [1, 1]} : vector<16x768xbf16> to vector<8x128xbf16>
    %57 = vector.extract_strided_slice %5 {offsets = [8, 640], sizes = [8, 128], strides = [1, 1]} : vector<16x768xbf16> to vector<8x128xbf16>
    %cst_16 = arith.constant dense<0.000000e+00> : vector<8x8xf32>
    %58 = tpu.matmul %55, %56, %cst_16 {dimension_numbers = #tpu.dot_dimension_numbers<[1], [1], [0], [0], [0, 0, 1, 0], [], []>} : vector<8x128xbf16>, vector<8x128xbf16>, vector<8x8xf32> -> vector<8x8xf32>
    %cst_17 = arith.constant dense<0xFF800000> : vector<8xf32>
    %59 = vector.multi_reduction <maximumf>, %58, %cst_17 [1] : vector<8x8xf32> to vector<8xf32>
    %60 = vector.shape_cast %59 : vector<8xf32> to vector<8x1xf32>
    %61 = vector.broadcast %60 : vector<8x1xf32> to vector<8x8xf32>
    %62 = arith.subf %58, %61 : vector<8x8xf32>
    %63 = math.exp %62 : vector<8x8xf32>
    %cst_18 = arith.constant dense<0.000000e+00> : vector<8xf32>
    %64 = vector.multi_reduction <add>, %63, %cst_18 [1] : vector<8x8xf32> to vector<8xf32>
    %65 = vector.shape_cast %64 : vector<8xf32> to vector<8x1xf32>
    %66 = tpu.reciprocal %65 : vector<8x1xf32> -> vector<8x1xf32>
    %67 = vector.broadcast %66 : vector<8x1xf32> to vector<8x8xf32>
    %68 = arith.mulf %63, %67 : vector<8x8xf32>
    %69 = arith.truncf %68 : vector<8x8xf32> to vector<8x8xbf16>
    %cst_19 = arith.constant dense<0.000000e+00> : vector<8x128xf32>
    %70 = tpu.matmul %69, %57, %cst_19 {dimension_numbers = #tpu.dot_dimension_numbers<[1], [0], [0], [1], [0, 0, 1, 1], [], []>} : vector<8x8xbf16>, vector<8x128xbf16>, vector<8x128xf32> -> vector<8x128xf32>
    %71 = tpu.concatenate %54, %70 in 1 : vector<8x128xf32>, vector<8x128xf32> -> vector<8x256xf32>
    %72 = tpu.concatenate %38, %71 in 0 : vector<8x256xf32>, vector<8x256xf32> -> vector<16x256xf32>
    %73 = arith.truncf %72 : vector<16x256xf32> to vector<16x256xbf16>
    %c0_20 = arith.constant 0 : index
    %c0_21 = arith.constant 0 : index
    %74 = vector.load %arg2[%c0_20, %c0_21] : memref<256x128xbf16, #tpu.memory_space<vmem>>, vector<256x128xbf16>
    %cst_22 = arith.constant dense<0.000000e+00> : vector<16x128xf32>
    %75 = tpu.matmul %73, %74, %cst_22 {dimension_numbers = #tpu.dot_dimension_numbers<[1], [0], [0], [1], [0, 0, 1, 1], [], []>} : vector<16x256xbf16>, vector<256x128xbf16>, vector<16x128xf32> -> vector<16x128xf32>
    %c0_23 = arith.constant 0 : index
    %c0_24 = arith.constant 0 : index
    %76 = vector.load %arg3[%c0_23, %c0_24] : memref<1x128xf32, #tpu.memory_space<vmem>>, vector<1x128xf32>
    %77 = vector.broadcast %76 : vector<1x128xf32> to vector<16x128xf32>
    %78 = arith.addf %75, %77 : vector<16x128xf32>
    %79 = vector.shape_cast %78 : vector<16x128xf32> to vector<2x8x128xf32>
    %c0_25 = arith.constant 0 : index
    %c0_26 = arith.constant 0 : index
    %c0_27 = arith.constant 0 : index
    %80 = vector.load %arg4[%c0_25, %c0_26, %c0_27] : memref<2x8x128xf32, #tpu.memory_space<vmem>>, vector<2x8x128xf32>
    tpu.vector_store %arg4[%c0_25, %c0_26, %c0_27], %79 {strides = array<i32>} : memref<2x8x128xf32, #tpu.memory_space<vmem>>, vector<2x8x128xf32>,
    return
  }
}

</mosaic_0001>

<llo_original>
// kernel: attention_forward.1
$region0: #{attention_forward.1}
  #allocation0 [shape = 'u32[]', space=smem, size = 0x4, offset = 0x4, fixed_abs, tag = 'smem constant byte address 0x4 - core index']
  #allocation1 [shape = 'u32[144,128]{1,0:T(1,128)}', space=vmem, size = 0x12000, scoped, tag = 'internal scratch']
  %s0 = inlined_call_operand.hbm [shape: f32[2,8,128], index: 0, kind: input, shape index: {}]
  %s1 = inlined_call_operand.hbm [shape: bf16[128,768], index: 1, kind: input, shape index: {}]
  %s2 = inlined_call_operand.hbm [shape: bf16[256,128], index: 2, kind: input, shape index: {}]
  %s3 = inlined_call_operand.vmem [shape: f32[1,128], index: 3, kind: input, shape index: {}]
  %s4 = inlined_call_operand.hbm [shape: f32[2,8,128], index: 4, kind: output, shape index: {}]
  %s5 = sld [smem:[#allocation0]]
  $region38: #{attention_forward.1} parent=0
    _
  %s7 = ssub.s32 1, %s5
  %s8 = scalar_select 0, %s7, %s5
  $region1: #{attention_forward.1} parent=0
    #allocation2 [shape = 'u8[8192]{0}', space=vmem, size = 0x2000, scoped, tag = 'input window, operand 0, single buffered']
    #allocation3 [shape = 's32[1]{0}', space=sflag, size = 0x4, scoped, tag = 'scoped memory for attention_forward.1']
    #allocation4 [shape = 's32[1]{0}', space=sflag, size = 0x4, scoped, tag = 'scoped memory for attention_forward.1']
    #allocation5 [shape = 'u8[196608]{0}', space=vmem, size = 0x30000, scoped, tag = 'input window, operand 1, single buffered']
    #allocation6 [shape = 's32[1]{0}', space=sflag, size = 0x4, scoped, tag = 'scoped memory for attention_forward.1']
    #allocation7 [shape = 'u8[65536]{0}', space=vmem, size = 0x10000, scoped, tag = 'input window, operand 2, single buffered']
    #allocation8 [shape = 'u8[8192]{0}', space=vmem, size = 0x2000, scoped, tag = 'output window, operand 0, single buffered']
    %9 = vsyncpa [#allocation3], 0
    %10 = vsyncpa [#allocation6], 0
    %11 = vsyncpa [#allocation4], 0
    // Predicated region
    $region2: #{attention_forward.1} parent=1 // pred_check
      _
    $region3: #{attention_forward.1} parent=1 // pred_check_branch
      %13 = sbr.rel (0) target = $region5
    $region4: #{attention_forward.1} parent=1 // pred_region
      %s15 = ssub.s32 256, 256
      %16 = vsyncadd [#allocation3], %s15
      %s17 = sshll.u32 [#allocation2], 4
      %s18 = int_to_ptr.vmem [resolvable:$true] %s17
      %23 = dma.hbm_to_vmem [thread:$0]  %s0, 256, %s18, [#allocation3], 128, 128, 8
    $region5: #{attention_forward.1} parent=1 // pred_fallthru
      _
    // Predicated region
    $region6: #{attention_forward.1} parent=1 // pred_check
      _
    $region7: #{attention_forward.1} parent=1 // pred_check_branch
      %25 = sbr.rel (0) target = $region9
    $region8: #{attention_forward.1} parent=1 // pred_region
      %s27 = ssub.s32 6144, 6144
      %28 = vsyncadd [#allocation6], %s27
      %s29 = sshll.u32 [#allocation5], 4
      %s30 = int_to_ptr.vmem [resolvable:$true] %s29
      %35 = dma.hbm_to_vmem [thread:$0]  %s1, 6144, %s30, [#allocation6], 384, 384, 24
    $region9: #{attention_forward.1} parent=1 // pred_fallthru
      _
    // Predicated region
    $region10: #{attention_forward.1} parent=1 // pred_check
      _
    $region11: #{attention_forward.1} parent=1 // pred_check_branch
      %37 = sbr.rel (0) target = $region13
    $region12: #{attention_forward.1} parent=1 // pred_region
      %s39 = ssub.s32 2048, 2048
      %40 = vsyncadd [#allocation6], %s39
      %s41 = sshll.u32 [#allocation7], 4
      %s42 = int_to_ptr.vmem [resolvable:$true] %s41
      %47 = dma.hbm_to_vmem [thread:$0]  %s2, 2048, %s42, [#allocation6], 64, 64, 4
    $region13: #{attention_forward.1} parent=1 // pred_fallthru
      _
    // Predicated region
    $region14: #{attention_forward.1} parent=1 // pred_check
      _
    $region15: #{attention_forward.1} parent=1 // pred_check_branch
      %49 = sbr.rel (0) target = $region17
    $region16: #{attention_forward.1} parent=1 // pred_region
      _
    $region17: #{attention_forward.1} parent=1 // pred_fallthru
      _
    // Predicated region
    $region18: #{attention_forward.1} parent=1 // pred_check
      _
    $region19: #{attention_forward.1} parent=1 // pred_check_branch
      %51 = sbr.rel (0) target = $region21
    $region20: #{attention_forward.1} parent=1 // pred_region
      %52 = dma.done [#allocation3], 256
    $region21: #{attention_forward.1} parent=1 // pred_fallthru
      _
    // Predicated region
    $region22: #{attention_forward.1} parent=1 // pred_check
      _
    $region23: #{attention_forward.1} parent=1 // pred_check_branch
      %54 = sbr.rel (0) target = $region25
    $region24: #{attention_forward.1} parent=1 // pred_region
      %55 = dma.done [#allocation6], 6144
    $region25: #{attention_forward.1} parent=1 // pred_fallthru
      _
    // Predicated region
    $region26: #{attention_forward.1} parent=1 // pred_check
      _
    $region27: #{attention_forward.1} parent=1 // pred_check_branch
      %57 = sbr.rel (0) target = $region29
    $region28: #{attention_forward.1} parent=1 // pred_region
      %58 = dma.done [#allocation6], 2048
    $region29: #{attention_forward.1} parent=1 // pred_fallthru
      _
    %v60 = vld [vmem:[#allocation2] sm:$0xff]
    %v61 = vld [vmem:[#allocation2 + $0x8] sm:$0xff]
    %v62 = vpack.c.bf16 %v61, %v60
    %v63 = vld [vmem:[#allocation5] sm:$0xff]
    %v64 = vld [vmem:[#allocation5 + $0x8] sm:$0xff]
    %v65 = vld [vmem:[#allocation5 + $0x10] sm:$0xff]
    %v66 = vld [vmem:[#allocation5 + $0x18] sm:$0xff]
    %v67 = vld [vmem:[#allocation5 + $0x20] sm:$0xff]
    %v68 = vld [vmem:[#allocation5 + $0x28] sm:$0xff]
    %v69 = vld [vmem:[#allocation5 + $0x30] sm:$0xff]
    %v70 = vld [vmem:[#allocation5 + $0x38] sm:$0xff]
    %v71 = vld [vmem:[#allocation5 + $0x40] sm:$0xff]
    %v72 = vld [vmem:[#allocation5 + $0x48] sm:$0xff]
    %v73 = vld [vmem:[#allocation5 + $0x50] sm:$0xff]
    %v74 = vld [vmem:[#allocation5 + $0x58] sm:$0xff]
    %v75 = vld [vmem:[#allocation5 + $0x60] sm:$0xff]
    %v76 = vld [vmem:[#allocation5 + $0x68] sm:$0xff]
    %v77 = vld [vmem:[#allocation5 + $0x70] sm:$0xff]
    %v78 = vld [vmem:[#allocation5 + $0x78] sm:$0xff]
    %v79 = vld [vmem:[#allocation5 + $0x80] sm:$0xff]
    %v80 = vld [vmem:[#allocation5 + $0x88] sm:$0xff]
    %v81 = vld [vmem:[#allocation5 + $0x90] sm:$0xff]
    %v82 = vld [vmem:[#allocation5 + $0x98] sm:$0xff]
    %v83 = vld [vmem:[#allocation5 + $0xa0] sm:$0xff]
    %v84 = vld [vmem:[#allocation5 + $0xa8] sm:$0xff]
    %v85 = vld [vmem:[#allocation5 + $0xb0] sm:$0xff]
    %v86 = vld [vmem:[#allocation5 + $0xb8] sm:$0xff]
    %v87 = vld [vmem:[#allocation5 + $0xc0] sm:$0xff]
    %v88 = vld [vmem:[#allocation5 + $0xc8] sm:$0xff]
    %v89 = vld [vmem:[#allocation5 + $0xd0] sm:$0xff]
    %v90 = vld [vmem:[#allocation5 + $0xd8] sm:$0xff]
    %v91 = vld [vmem:[#allocation5 + $0xe0] sm:$0xff]
    %v92 = vld [vmem:[#allocation5 + $0xe8] sm:$0xff]
    %v93 = vld [vmem:[#allocation5 + $0xf0] sm:$0xff]
    %v94 = vld [vmem:[#allocation5 + $0xf8] sm:$0xff]
    %v95 = vld [vmem:[#allocation5 + $0x100] sm:$0xff]
    %v96 = vld [vmem:[#allocation5 + $0x108] sm:$0xff]
    %v97 = vld [vmem:[#allocation5 + $0x110] sm:$0xff]
    %v98 = vld [vmem:[#allocation5 + $0x118] sm:$0xff]
    %v99 = vld [vmem:[#allocation5 + $0x120] sm:$0xff]
    %v100 = vld [vmem:[#allocation5 + $0x128] sm:$0xff]
    %v101 = vld [vmem:[#allocation5 + $0x130] sm:$0xff]
    %v102 = vld [vmem:[#allocation5 + $0x138] sm:$0xff]
    %v103 = vld [vmem:[#allocation5 + $0x140] sm:$0xff]
    %v104 = vld [vmem:[#allocation5 + $0x148] sm:$0xff]
    %v105 = vld [vmem:[#allocation5 + $0x150] sm:$0xff]
    %v106 = vld [vmem:[#allocation5 + $0x158] sm:$0xff]
    %v107 = vld [vmem:[#allocation5 + $0x160] sm:$0xff]
    %v108 = vld [vmem:[#allocation5 + $0x168] sm:$0xff]
    %v109 = vld [vmem:[#allocation5 + $0x170] sm:$0xff]
    %v110 = vld [vmem:[#allocation5 + $0x178] sm:$0xff]
    %v159 = vunpack.c.l.b16 %v63
    %v160 = vunpack.c.h.b16 %v63
    %v161 = vunpack.c.l.b16 %v64
    %v162 = vunpack.c.h.b16 %v64
    %v163 = vunpack.c.l.b16 %v65
    %v164 = vunpack.c.h.b16 %v65
    %v165 = vunpack.c.l.b16 %v66
    %v166 = vunpack.c.h.b16 %v66
    %v167 = vunpack.c.l.b16 %v67
    %v168 = vunpack.c.h.b16 %v67
    %v169 = vunpack.c.l.b16 %v68
    %v170 = vunpack.c.h.b16 %v68
    %v171 = vunpack.c.l.b16 %v69
    %v172 = vunpack.c.h.b16 %v69
    %v173 = vunpack.c.l.b16 %v70
    %v174 = vunpack.c.h.b16 %v70
    %v175 = vunpack.c.l.b16 %v71
    %v176 = vunpack.c.h.b16 %v71
    %v177 = vunpack.c.l.b16 %v72
    %v178 = vunpack.c.h.b16 %v72
    %v179 = vunpack.c.l.b16 %v73
    %v180 = vunpack.c.h.b16 %v73
    %v181 = vunpack.c.l.b16 %v74
    %v182 = vunpack.c.h.b16 %v74
    %v183 = vunpack.c.l.b16 %v75
    %v184 = vunpack.c.h.b16 %v75
    %v185 = vunpack.c.l.b16 %v76
    %v186 = vunpack.c.h.b16 %v76
    %v187 = vunpack.c.l.b16 %v77
    %v188 = vunpack.c.h.b16 %v77
    %v189 = vunpack.c.l.b16 %v78
    %v190 = vunpack.c.h.b16 %v78
    %v191 = vunpack.c.l.b16 %v79
    %v192 = vunpack.c.h.b16 %v79
    %v193 = vunpack.c.l.b16 %v80
    %v194 = vunpack.c.h.b16 %v80
    %v195 = vunpack.c.l.b16 %v81
    %v196 = vunpack.c.h.b16 %v81
    %v197 = vunpack.c.l.b16 %v82
    %v198 = vunpack.c.h.b16 %v82
    %v199 = vunpack.c.l.b16 %v83
    %v200 = vunpack.c.h.b16 %v83
    %v201 = vunpack.c.l.b16 %v84
    %v202 = vunpack.c.h.b16 %v84
    %v203 = vunpack.c.l.b16 %v85
    %v204 = vunpack.c.h.b16 %v85
    %v205 = vunpack.c.l.b16 %v86
    %v206 = vunpack.c.h.b16 %v86
    %v207 = vunpack.c.l.b16 %v87
    %v208 = vunpack.c.h.b16 %v87
    %v209 = vunpack.c.l.b16 %v88
    %v210 = vunpack.c.h.b16 %v88
    %v211 = vunpack.c.l.b16 %v89
    %v212 = vunpack.c.h.b16 %v89
    %v213 = vunpack.c.l.b16 %v90
    %v214 = vunpack.c.h.b16 %v90
    %v215 = vunpack.c.l.b16 %v91
    %v216 = vunpack.c.h.b16 %v91
    %v217 = vunpack.c.l.b16 %v92
    %v218 = vunpack.c.h.b16 %v92
    %v219 = vunpack.c.l.b16 %v93
    %v220 = vunpack.c.h.b16 %v93
    %v221 = vunpack.c.l.b16 %v94
    %v222 = vunpack.c.h.b16 %v94
    %v223 = vunpack.c.l.b16 %v95
    %v224 = vunpack.c.h.b16 %v95
    %v225 = vunpack.c.l.b16 %v96
    %v226 = vunpack.c.h.b16 %v96
    %v227 = vunpack.c.l.b16 %v97
    %v228 = vunpack.c.h.b16 %v97
    %v229 = vunpack.c.l.b16 %v98
    %v230 = vunpack.c.h.b16 %v98
    %v231 = vunpack.c.l.b16 %v99
    %v232 = vunpack.c.h.b16 %v99
    %v233 = vunpack.c.l.b16 %v100
    %v234 = vunpack.c.h.b16 %v100
    %v235 = vunpack.c.l.b16 %v101
    %v236 = vunpack.c.h.b16 %v101
    %v237 = vunpack.c.l.b16 %v102
    %v238 = vunpack.c.h.b16 %v102
    %v239 = vunpack.c.l.b16 %v103
    %v240 = vunpack.c.h.b16 %v103
    %v241 = vunpack.c.l.b16 %v104
    %v242 = vunpack.c.h.b16 %v104
    %v243 = vunpack.c.l.b16 %v105
    %v244 = vunpack.c.h.b16 %v105
    %v245 = vunpack.c.l.b16 %v106
    %v246 = vunpack.c.h.b16 %v106
    %v247 = vunpack.c.l.b16 %v107
    %v248 = vunpack.c.h.b16 %v107
    %v249 = vunpack.c.l.b16 %v108
    %v250 = vunpack.c.h.b16 %v108
    %v251 = vunpack.c.l.b16 %v109
    %v252 = vunpack.c.h.b16 %v109
    %v253 = vunpack.c.l.b16 %v110
    %v254 = vunpack.c.h.b16 %v110
    %v255 = vpack.c.b16 %v165, %v159
    %v256 = vpack.c.b16 %v166, %v160
    %v257 = vpack.c.b16 %v167, %v161
    %v258 = vpack.c.b16 %v168, %v162
    %v259 = vpack.c.b16 %v169, %v163
    %v260 = vpack.c.b16 %v170, %v164
    %v261 = vpack.c.b16 %v177, %v171
    %v262 = vpack.c.b16 %v178, %v172
    %v263 = vpack.c.b16 %v179, %v173
    %v264 = vpack.c.b16 %v180, %v174
    %v265 = vpack.c.b16 %v181, %v175
    %v266 = vpack.c.b16 %v182, %v176
    %v267 = vpack.c.b16 %v189, %v183
    %v268 = vpack.c.b16 %v190, %v184
    %v269 = vpack.c.b16 %v191, %v185
    %v270 = vpack.c.b16 %v192, %v186
    %v271 = vpack.c.b16 %v193, %v187
    %v272 = vpack.c.b16 %v194, %v188
    %v273 = vpack.c.b16 %v201, %v195
    %v274 = vpack.c.b16 %v202, %v196
    %v275 = vpack.c.b16 %v203, %v197
    %v276 = vpack.c.b16 %v204, %v198
    %v277 = vpack.c.b16 %v205, %v199
    %v278 = vpack.c.b16 %v206, %v200
    %v279 = vpack.c.b16 %v213, %v207
    %v280 = vpack.c.b16 %v214, %v208
    %v281 = vpack.c.b16 %v215, %v209
    %v282 = vpack.c.b16 %v216, %v210
    %v283 = vpack.c.b16 %v217, %v211
    %v284 = vpack.c.b16 %v218, %v212
    %v285 = vpack.c.b16 %v225, %v219
    %v286 = vpack.c.b16 %v226, %v220
    %v287 = vpack.c.b16 %v227, %v221
    %v288 = vpack.c.b16 %v228, %v222
    %v289 = vpack.c.b16 %v229, %v223
    %v290 = vpack.c.b16 %v230, %v224
    %v291 = vpack.c.b16 %v237, %v231
    %v292 = vpack.c.b16 %v238, %v232
    %v293 = vpack.c.b16 %v239, %v233
    %v294 = vpack.c.b16 %v240, %v234
    %v295 = vpack.c.b16 %v241, %v235
    %v296 = vpack.c.b16 %v242, %v236
    %v297 = vpack.c.b16 %v249, %v243
    %v298 = vpack.c.b16 %v250, %v244
    %v299 = vpack.c.b16 %v251, %v245
    %v300 = vpack.c.b16 %v252, %v246
    %v301 = vpack.c.b16 %v253, %v247
    %v302 = vpack.c.b16 %v254, %v248
    %351 = vmatprep.subr.bf16.mxu0 %v256
    %352 = vmatpush1.bf16.msra.mxu0 %v255
    %353 = vmatprep.subr.bf16.mxu0 %v262
    %354 = vmatpush1.bf16.msra.mxu0 %v261
    %355 = vmatprep.subr.bf16.mxu0 %v268
    %356 = vmatpush1.bf16.msra.mxu0 %v267
    %357 = vmatprep.subr.bf16.mxu0 %v274
    %358 = vmatpush1.bf16.msra.mxu0 %v273
    %359 = vmatprep.subr.bf16.mxu0 %v280
    %360 = vmatpush1.bf16.msra.mxu0 %v279
    %361 = vmatprep.subr.bf16.mxu0 %v286
    %362 = vmatpush1.bf16.msra.mxu0 %v285
    %363 = vmatprep.subr.bf16.mxu0 %v292
    %364 = vmatpush1.bf16.msra.mxu0 %v291
    %365 = vmatprep.subr.bf16.mxu0 %v298
    %366 = vmatpush1.bf16.msra.mxu0 %v297
    %367 = vmatprep.subr.bf16.mxu0 0
    %368 = vmatpush1.bf16.msra.mxu0 0
    %369 = vmatprep.subr.bf16.mxu0 0
    %370 = vmatpush1.bf16.msra.mxu0 0
    %371 = vmatprep.subr.bf16.mxu0 0
    %372 = vmatpush1.bf16.msra.mxu0 0
    %373 = vmatprep.subr.bf16.mxu0 0
    %374 = vmatpush1.bf16.msra.mxu0 0
    %375 = vmatprep.subr.bf16.mxu0 0
    %376 = vmatpush1.bf16.msra.mxu0 0
    %377 = vmatprep.subr.bf16.mxu0 0
    %378 = vmatpush1.bf16.msra.mxu0 0
    %379 = vmatprep.subr.bf16.mxu0 0
    %380 = vmatpush1.bf16.msra.mxu0 0
    %381 = vmatprep.subr.bf16.mxu0 0
    %382 = vmatpush1.bf16.msra.mxu0 0
    %383 = vmatprep.mubr.bf16.mxu0 0
    %384 = vmatmul.mubr.bf16.gmra.mrb[0].mxu0 %v62
    %v385 = vpop.f32.mrb[0].mxu0
    %v386 = vadd.f32 0.0, %v385
    %v387 = vpop.f32.mrb[0].mxu0
    %v388 = vadd.f32 0.0, %v387
    %v389 = vpop.f32.mrb[0].mxu0
    %v390 = vadd.f32 0.0, %v389
    %v391 = vpop.f32.mrb[0].mxu0
    %v392 = vadd.f32 0.0, %v391
    %393 = vdwg.mxu0
    %394 = vmatprep.subr.bf16.mxu0 %v258
    %395 = vmatpush1.bf16.msra.mxu0 %v257
    %396 = vmatprep.subr.bf16.mxu0 %v264
    %397 = vmatpush1.bf16.msra.mxu0 %v263
    %398 = vmatprep.subr.bf16.mxu0 %v270
    %399 = vmatpush1.bf16.msra.mxu0 %v269
    %400 = vmatprep.subr.bf16.mxu0 %v276
    %401 = vmatpush1.bf16.msra.mxu0 %v275
    %402 = vmatprep.subr.bf16.mxu0 %v282
    %403 = vmatpush1.bf16.msra.mxu0 %v281
    %404 = vmatprep.subr.bf16.mxu0 %v288
    %405 = vmatpush1.bf16.msra.mxu0 %v287
    %406 = vmatprep.subr.bf16.mxu0 %v294
    %407 = vmatpush1.bf16.msra.mxu0 %v293
    %408 = vmatprep.subr.bf16.mxu0 %v300
    %409 = vmatpush1.bf16.msra.mxu0 %v299
    %410 = vmatprep.subr.bf16.mxu0 0
    %411 = vmatpush1.bf16.msra.mxu0 0
    %412 = vmatprep.subr.bf16.mxu0 0
    %413 = vmatpush1.bf16.msra.mxu0 0
    %414 = vmatprep.subr.bf16.mxu0 0
    %415 = vmatpush1.bf16.msra.mxu0 0
    %416 = vmatprep.subr.bf16.mxu0 0
    %417 = vmatpush1.bf16.msra.mxu0 0
    %418 = vmatprep.subr.bf16.mxu0 0
    %419 = vmatpush1.bf16.msra.mxu0 0
    %420 = vmatprep.subr.bf16.mxu0 0
    %421 = vmatpush1.bf16.msra.mxu0 0
    %422 = vmatprep.subr.bf16.mxu0 0
    %423 = vmatpush1.bf16.msra.mxu0 0
    %424 = vmatprep.subr.bf16.mxu0 0
    %425 = vmatpush1.bf16.msra.mxu0 0
    %426 = vmatprep.mubr.bf16.mxu0 0
    %427 = vmatmul.mubr.bf16.gmra.mrb[0].mxu0 %v62
    %v428 = vpop.f32.mrb[0].mxu0
    %v429 = vadd.f32 0.0, %v428
    %v430 = vpop.f32.mrb[0].mxu0
    %v431 = vadd.f32 0.0, %v430
    %v432 = vpop.f32.mrb[0].mxu0
    %v433 = vadd.f32 0.0, %v432
    %v434 = vpop.f32.mrb[0].mxu0
    %v435 = vadd.f32 0.0, %v434
    %436 = vdwg.mxu0
    %437 = vmatprep.subr.bf16.mxu0 %v260
    %438 = vmatpush1.bf16.msra.mxu0 %v259
    %439 = vmatprep.subr.bf16.mxu0 %v266
    %440 = vmatpush1.bf16.msra.mxu0 %v265
    %441 = vmatprep.subr.bf16.mxu0 %v272
    %442 = vmatpush1.bf16.msra.mxu0 %v271
    %443 = vmatprep.subr.bf16.mxu0 %v278
    %444 = vmatpush1.bf16.msra.mxu0 %v277
    %445 = vmatprep.subr.bf16.mxu0 %v284
    %446 = vmatpush1.bf16.msra.mxu0 %v283
    %447 = vmatprep.subr.bf16.mxu0 %v290
    %448 = vmatpush1.bf16.msra.mxu0 %v289
    %449 = vmatprep.subr.bf16.mxu0 %v296
    %450 = vmatpush1.bf16.msra.mxu0 %v295
    %451 = vmatprep.subr.bf16.mxu0 %v302
    %452 = vmatpush1.bf16.msra.mxu0 %v301
    %453 = vmatprep.subr.bf16.mxu0 0
    %454 = vmatpush1.bf16.msra.mxu0 0
    %455 = vmatprep.subr.bf16.mxu0 0
    %456 = vmatpush1.bf16.msra.mxu0 0
    %457 = vmatprep.subr.bf16.mxu0 0
    %458 = vmatpush1.bf16.msra.mxu0 0
    %459 = vmatprep.subr.bf16.mxu0 0
    %460 = vmatpush1.bf16.msra.mxu0 0
    %461 = vmatprep.subr.bf16.mxu0 0
    %462 = vmatpush1.bf16.msra.mxu0 0
    %463 = vmatprep.subr.bf16.mxu0 0
    %464 = vmatpush1.bf16.msra.mxu0 0
    %465 = vmatprep.subr.bf16.mxu0 0
    %466 = vmatpush1.bf16.msra.mxu0 0
    %467 = vmatprep.subr.bf16.mxu0 0
    %468 = vmatpush1.bf16.msra.mxu0 0
    %469 = vmatprep.mubr.bf16.mxu0 0
    %470 = vmatmul.mubr.bf16.gmra.mrb[0].mxu0 %v62
    %v471 = vpop.f32.mrb[0].mxu0
    %v472 = vadd.f32 0.0, %v471
    %v473 = vpop.f32.mrb[0].mxu0
    %v474 = vadd.f32 0.0, %v473
    %v475 = vpop.f32.mrb[0].mxu0
    %v476 = vadd.f32 0.0, %v475
    %v477 = vpop.f32.mrb[0].mxu0
    %v478 = vadd.f32 0.0, %v477
    %479 = vdwg.mxu0
    %v480 = vpack.c.bf16 %v390, %v386
    %v481 = vpack.c.bf16 %v392, %v388
    %v482 = vpack.c.bf16 %v433, %v429
    %v483 = vpack.c.bf16 %v435, %v431
    %v484 = vpack.c.bf16 %v476, %v472
    %v485 = vpack.c.bf16 %v478, %v474
    %486 = vmatprep.subr.bf16.mxu0 0
    %487 = vmatpush1.bf16.xpose.msra.mxu0 %v482
    %488 = vmatprep.subr.bf16.mxu0 0
    %489 = vmatpush1.bf16.xpose.msra.mxu0 0
    %490 = vmatprep.subr.bf16.mxu0 0
    %491 = vmatpush1.bf16.xpose.msra.mxu0 0
    %492 = vmatprep.subr.bf16.mxu0 0
    %493 = vmatpush1.bf16.xpose.msra.mxu0 0
    %494 = vmatprep.subr.bf16.mxu0 0
    %495 = vmatpush1.bf16.xpose.msra.mxu0 0
    %496 = vmatprep.subr.bf16.mxu0 0
    %497 = vmatpush1.bf16.xpose.msra.mxu0 0
    %498 = vmatprep.subr.bf16.mxu0 0
    %499 = vmatpush1.bf16.xpose.msra.mxu0 0
    %500 = vmatprep.subr.bf16.mxu0 0
    %501 = vmatpush1.bf16.xpose.msra.mxu0 0
    %502 = vmatprep.subr.bf16.mxu0 0
    %503 = vmatpush1.bf16.xpose.msra.mxu0 0
    %504 = vmatprep.subr.bf16.mxu0 0
    %505 = vmatpush1.bf16.xpose.msra.mxu0 0
    %506 = vmatprep.subr.bf16.mxu0 0
    %507 = vmatpush1.bf16.xpose.msra.mxu0 0
    %508 = vmatprep.subr.bf16.mxu0 0
    %509 = vmatpush1.bf16.xpose.msra.mxu0 0
    %510 = vmatprep.subr.bf16.mxu0 0
    %511 = vmatpush1.bf16.xpose.msra.mxu0 0
    %512 = vmatprep.subr.bf16.mxu0 0
    %513 = vmatpush1.bf16.xpose.msra.mxu0 0
    %514 = vmatprep.subr.bf16.mxu0 0
    %515 = vmatpush1.bf16.xpose.msra.mxu0 0
    %516 = vmatprep.subr.bf16.mxu0 0
    %517 = vmatpush1.bf16.xpose.msra.mxu0 0
    %518 = vmatprep.mubr.bf16.mxu0 0
    %519 = vmatmul.mubr.bf16.gmra.mrb[0].mxu0 %v480
    %v520 = vpop.f32.mrb[0].mxu0
    %v521 = vadd.f32 0.0, %v520
    %v522 = vpop.f32.mrb[0].mxu0
    %v523 = vpop.f32.mrb[0].mxu0
    %v524 = vpop.f32.mrb[0].mxu0
    %525 = vdwg.mxu0
    %vm526 = vcmask 64512
    %v527 = vsel %vm526, %v521, -inf
    %528 = vmax.xlane.f32.xlu0 %v527
    %v529 = vpop.xlane.xlu0 %528
    %v530 = vsub.f32 %v521, %v529
    %v531 = vmul.f32 %v530, 1.442695
    %v532 = vpow.pop %v531
    %v533 = vsel %vm526, %v532, 0.0
    %534 = vadd.xlane.f32.xlu0 %v533
    %v535 = vpop.xlane.xlu0 %534
    %v536 = vrcp.pop %v535
    %v537 = vmul.f32 %v532, %v536
    %v538 = vpack.c.bf16 %v537, %v537
    %v540 = vsel %vm526, %v538, 0
    %vm542 = vcmask 1043456
    %v544 = vsel %vm542, %v484, 0
    %546 = vmatprep.subr.bf16.mxu0 0
    %547 = vmatpush1.bf16.msra.mxu0 %v544
    %548 = vmatprep.subr.bf16.mxu0 0
    %549 = vmatpush1.bf16.msra.mxu0 0
    %550 = vmatprep.subr.bf16.mxu0 0
    %551 = vmatpush1.bf16.msra.mxu0 0
    %552 = vmatprep.subr.bf16.mxu0 0
    %553 = vmatpush1.bf16.msra.mxu0 0
    %554 = vmatprep.subr.bf16.mxu0 0
    %555 = vmatpush1.bf16.msra.mxu0 0
    %556 = vmatprep.subr.bf16.mxu0 0
    %557 = vmatpush1.bf16.msra.mxu0 0
    %558 = vmatprep.subr.bf16.mxu0 0
    %559 = vmatpush1.bf16.msra.mxu0 0
    %560 = vmatprep.subr.bf16.mxu0 0
    %561 = vmatpush1.bf16.msra.mxu0 0
    %562 = vmatprep.subr.bf16.mxu0 0
    %563 = vmatpush1.bf16.msra.mxu0 0
    %564 = vmatprep.subr.bf16.mxu0 0
    %565 = vmatpush1.bf16.msra.mxu0 0
    %566 = vmatprep.subr.bf16.mxu0 0
    %567 = vmatpush1.bf16.msra.mxu0 0
    %568 = vmatprep.subr.bf16.mxu0 0
    %569 = vmatpush1.bf16.msra.mxu0 0
    %570 = vmatprep.subr.bf16.mxu0 0
    %571 = vmatpush1.bf16.msra.mxu0 0
    %572 = vmatprep.subr.bf16.mxu0 0
    %573 = vmatpush1.bf16.msra.mxu0 0
    %574 = vmatprep.subr.bf16.mxu0 0
    %575 = vmatpush1.bf16.msra.mxu0 0
    %576 = vmatprep.subr.bf16.mxu0 0
    %577 = vmatpush1.bf16.msra.mxu0 0
    %578 = vmatprep.mubr.bf16.mxu0 0
    %579 = vmatmul.mubr.bf16.gmra.mrb[0].mxu0 %v540
    %v580 = vpop.f32.mrb[0].mxu0
    %v581 = vadd.f32 0.0, %v580
    %v582 = vpop.f32.mrb[0].mxu0
    %v583 = vpop.f32.mrb[0].mxu0
    %v584 = vpop.f32.mrb[0].mxu0
    %585 = vdwg.mxu0
    %586 = vmatprep.subr.bf16.mxu0 0
    %587 = vmatpush1.bf16.xpose.msra.mxu0 %v483
    %588 = vmatprep.subr.bf16.mxu0 0
    %589 = vmatpush1.bf16.xpose.msra.mxu0 0
    %590 = vmatprep.subr.bf16.mxu0 0
    %591 = vmatpush1.bf16.xpose.msra.mxu0 0
    %592 = vmatprep.subr.bf16.mxu0 0
    %593 = vmatpush1.bf16.xpose.msra.mxu0 0
    %594 = vmatprep.subr.bf16.mxu0 0
    %595 = vmatpush1.bf16.xpose.msra.mxu0 0
    %596 = vmatprep.subr.bf16.mxu0 0
    %597 = vmatpush1.bf16.xpose.msra.mxu0 0
    %598 = vmatprep.subr.bf16.mxu0 0
    %599 = vmatpush1.bf16.xpose.msra.mxu0 0
    %600 = vmatprep.subr.bf16.mxu0 0
    %601 = vmatpush1.bf16.xpose.msra.mxu0 0
    %602 = vmatprep.subr.bf16.mxu0 0
    %603 = vmatpush1.bf16.xpose.msra.mxu0 0
    %604 = vmatprep.subr.bf16.mxu0 0
    %605 = vmatpush1.bf16.xpose.msra.mxu0 0
    %606 = vmatprep.subr.bf16.mxu0 0
    %607 = vmatpush1.bf16.xpose.msra.mxu0 0
    %608 = vmatprep.subr.bf16.mxu0 0
    %609 = vmatpush1.bf16.xpose.msra.mxu0 0
    %610 = vmatprep.subr.bf16.mxu0 0
    %611 = vmatpush1.bf16.xpose.msra.mxu0 0
    %612 = vmatprep.subr.bf16.mxu0 0
    %613 = vmatpush1.bf16.xpose.msra.mxu0 0
    %614 = vmatprep.subr.bf16.mxu0 0
    %615 = vmatpush1.bf16.xpose.msra.mxu0 0
    %616 = vmatprep.subr.bf16.mxu0 0
    %617 = vmatpush1.bf16.xpose.msra.mxu0 0
    %618 = vmatprep.mubr.bf16.mxu0 0
    %619 = vmatmul.mubr.bf16.gmra.mrb[0].mxu0 %v481
    %v620 = vpop.f32.mrb[0].mxu0
    %v621 = vadd.f32 0.0, %v620
    %v622 = vpop.f32.mrb[0].mxu0
    %v623 = vpop.f32.mrb[0].mxu0
    %v624 = vpop.f32.mrb[0].mxu0
    %625 = vdwg.mxu0
    %v626 = vsel %vm526, %v621, -inf
    %627 = vmax.xlane.f32.xlu0 %v626
    %v628 = vpop.xlane.xlu0 %627
    %v629 = vsub.f32 %v621, %v628
    %v630 = vmul.f32 %v629, 1.442695
    %v631 = vpow.pop %v630
    %v632 = vsel %vm526, %v631, 0.0
    %633 = vadd.xlane.f32.xlu0 %v632
    %v634 = vpop.xlane.xlu0 %633
    %v635 = vrcp.pop %v634
    %v636 = vmul.f32 %v631, %v635
    %v637 = vpack.c.bf16 %v636, %v636
    %v639 = vsel %vm526, %v637, 0
    %v642 = vsel %vm542, %v485, 0
    %644 = vmatprep.subr.bf16.mxu0 0
    %645 = vmatpush1.bf16.msra.mxu0 %v642
    %646 = vmatprep.subr.bf16.mxu0 0
    %647 = vmatpush1.bf16.msra.mxu0 0
    %648 = vmatprep.subr.bf16.mxu0 0
    %649 = vmatpush1.bf16.msra.mxu0 0
    %650 = vmatprep.subr.bf16.mxu0 0
    %651 = vmatpush1.bf16.msra.mxu0 0
    %652 = vmatprep.subr.bf16.mxu0 0
    %653 = vmatpush1.bf16.msra.mxu0 0
    %654 = vmatprep.subr.bf16.mxu0 0
    %655 = vmatpush1.bf16.msra.mxu0 0
    %656 = vmatprep.subr.bf16.mxu0 0
    %657 = vmatpush1.bf16.msra.mxu0 0
    %658 = vmatprep.subr.bf16.mxu0 0
    %659 = vmatpush1.bf16.msra.mxu0 0
    %660 = vmatprep.subr.bf16.mxu0 0
    %661 = vmatpush1.bf16.msra.mxu0 0
    %662 = vmatprep.subr.bf16.mxu0 0
    %663 = vmatpush1.bf16.msra.mxu0 0
    %664 = vmatprep.subr.bf16.mxu0 0
    %665 = vmatpush1.bf16.msra.mxu0 0
    %666 = vmatprep.subr.bf16.mxu0 0
    %667 = vmatpush1.bf16.msra.mxu0 0
    %668 = vmatprep.subr.bf16.mxu0 0
    %669 = vmatpush1.bf16.msra.mxu0 0
    %670 = vmatprep.subr.bf16.mxu0 0
    %671 = vmatpush1.bf16.msra.mxu0 0
    %672 = vmatprep.subr.bf16.mxu0 0
    %673 = vmatpush1.bf16.msra.mxu0 0
    %674 = vmatprep.subr.bf16.mxu0 0
    %675 = vmatpush1.bf16.msra.mxu0 0
    %676 = vmatprep.mubr.bf16.mxu0 0
    %677 = vmatmul.mubr.bf16.gmra.mrb[0].mxu0 %v639
    %v678 = vpop.f32.mrb[0].mxu0
    %v679 = vadd.f32 0.0, %v678
    %v680 = vpop.f32.mrb[0].mxu0
    %v681 = vpop.f32.mrb[0].mxu0
    %v682 = vpop.f32.mrb[0].mxu0
    %683 = vdwg.mxu0
    %v685 = vrot.slane %v480, 4
    %v688 = vrot.slane %v482, 4
    %690 = vmatprep.subr.bf16.mxu0 0
    %691 = vmatpush1.bf16.xpose.msra.mxu0 %v688
    %692 = vmatprep.subr.bf16.mxu0 0
    %693 = vmatpush1.bf16.xpose.msra.mxu0 0
    %694 = vmatprep.subr.bf16.mxu0 0
    %695 = vmatpush1.bf16.xpose.msra.mxu0 0
    %696 = vmatprep.subr.bf16.mxu0 0
    %697 = vmatpush1.bf16.xpose.msra.mxu0 0
    %698 = vmatprep.subr.bf16.mxu0 0
    %699 = vmatpush1.bf16.xpose.msra.mxu0 0
    %700 = vmatprep.subr.bf16.mxu0 0
    %701 = vmatpush1.bf16.xpose.msra.mxu0 0
    %702 = vmatprep.subr.bf16.mxu0 0
    %703 = vmatpush1.bf16.xpose.msra.mxu0 0
    %704 = vmatprep.subr.bf16.mxu0 0
    %705 = vmatpush1.bf16.xpose.msra.mxu0 0
    %706 = vmatprep.subr.bf16.mxu0 0
    %707 = vmatpush1.bf16.xpose.msra.mxu0 0
    %708 = vmatprep.subr.bf16.mxu0 0
    %709 = vmatpush1.bf16.xpose.msra.mxu0 0
    %710 = vmatprep.subr.bf16.mxu0 0
    %711 = vmatpush1.bf16.xpose.msra.mxu0 0
    %712 = vmatprep.subr.bf16.mxu0 0
    %713 = vmatpush1.bf16.xpose.msra.mxu0 0
    %714 = vmatprep.subr.bf16.mxu0 0
    %715 = vmatpush1.bf16.xpose.msra.mxu0 0
    %716 = vmatprep.subr.bf16.mxu0 0
    %717 = vmatpush1.bf16.xpose.msra.mxu0 0
    %718 = vmatprep.subr.bf16.mxu0 0
    %719 = vmatpush1.bf16.xpose.msra.mxu0 0
    %720 = vmatprep.subr.bf16.mxu0 0
    %721 = vmatpush1.bf16.xpose.msra.mxu0 0
    %722 = vmatprep.mubr.bf16.mxu0 0
    %723 = vmatmul.mubr.bf16.gmra.mrb[0].mxu0 %v685
    %v724 = vpop.f32.mrb[0].mxu0
    %v725 = vadd.f32 0.0, %v724
    %v726 = vpop.f32.mrb[0].mxu0
    %v727 = vpop.f32.mrb[0].mxu0
    %v728 = vpop.f32.mrb[0].mxu0
    %729 = vdwg.mxu0
    %v730 = vsel %vm526, %v725, -inf
    %731 = vmax.xlane.f32.xlu0 %v730
    %v732 = vpop.xlane.xlu0 %731
    %v733 = vsub.f32 %v725, %v732
    %v734 = vmul.f32 %v733, 1.442695
    %v735 = vpow.pop %v734
    %v736 = vsel %vm526, %v735, 0.0
    %737 = vadd.xlane.f32.xlu0 %v736
    %v738 = vpop.xlane.xlu0 %737
    %v739 = vrcp.pop %v738
    %v740 = vmul.f32 %v735, %v739
    %v741 = vpack.c.bf16 %v740, %v740
    %v743 = vrot.slane %v484, 4
    %v745 = vsel %vm526, %v741, 0
    %v748 = vsel %vm542, %v743, 0
    %750 = vmatprep.subr.bf16.mxu0 0
    %751 = vmatpush1.bf16.msra.mxu0 %v748
    %752 = vmatprep.subr.bf16.mxu0 0
    %753 = vmatpush1.bf16.msra.mxu0 0
    %754 = vmatprep.subr.bf16.mxu0 0
    %755 = vmatpush1.bf16.msra.mxu0 0
    %756 = vmatprep.subr.bf16.mxu0 0
    %757 = vmatpush1.bf16.msra.mxu0 0
    %758 = vmatprep.subr.bf16.mxu0 0
    %759 = vmatpush1.bf16.msra.mxu0 0
    %760 = vmatprep.subr.bf16.mxu0 0
    %761 = vmatpush1.bf16.msra.mxu0 0
    %762 = vmatprep.subr.bf16.mxu0 0
    %763 = vmatpush1.bf16.msra.mxu0 0
    %764 = vmatprep.subr.bf16.mxu0 0
    %765 = vmatpush1.bf16.msra.mxu0 0
    %766 = vmatprep.subr.bf16.mxu0 0
    %767 = vmatpush1.bf16.msra.mxu0 0
    %768 = vmatprep.subr.bf16.mxu0 0
    %769 = vmatpush1.bf16.msra.mxu0 0
    %770 = vmatprep.subr.bf16.mxu0 0
    %771 = vmatpush1.bf16.msra.mxu0 0
    %772 = vmatprep.subr.bf16.mxu0 0
    %773 = vmatpush1.bf16.msra.mxu0 0
    %774 = vmatprep.subr.bf16.mxu0 0
    %775 = vmatpush1.bf16.msra.mxu0 0
    %776 = vmatprep.subr.bf16.mxu0 0
    %777 = vmatpush1.bf16.msra.mxu0 0
    %778 = vmatprep.subr.bf16.mxu0 0
    %779 = vmatpush1.bf16.msra.mxu0 0
    %780 = vmatprep.subr.bf16.mxu0 0
    %781 = vmatpush1.bf16.msra.mxu0 0
    %782 = vmatprep.mubr.bf16.mxu0 0
    %783 = vmatmul.mubr.bf16.gmra.mrb[0].mxu0 %v745
    %v784 = vpop.f32.mrb[0].mxu0
    %v785 = vadd.f32 0.0, %v784
    %v786 = vpop.f32.mrb[0].mxu0
    %v787 = vpop.f32.mrb[0].mxu0
    %v788 = vpop.f32.mrb[0].mxu0
    %789 = vdwg.mxu0
    %v791 = vrot.slane %v481, 4
    %v794 = vrot.slane %v483, 4
    %796 = vmatprep.subr.bf16.mxu0 0
    %797 = vmatpush1.bf16.xpose.msra.mxu0 %v794
    %798 = vmatprep.subr.bf16.mxu0 0
    %799 = vmatpush1.bf16.xpose.msra.mxu0 0
    %800 = vmatprep.subr.bf16.mxu0 0
    %801 = vmatpush1.bf16.xpose.msra.mxu0 0
    %802 = vmatprep.subr.bf16.mxu0 0
    %803 = vmatpush1.bf16.xpose.msra.mxu0 0
    %804 = vmatprep.subr.bf16.mxu0 0
    %805 = vmatpush1.bf16.xpose.msra.mxu0 0
    %806 = vmatprep.subr.bf16.mxu0 0
    %807 = vmatpush1.bf16.xpose.msra.mxu0 0
    %808 = vmatprep.subr.bf16.mxu0 0
    %809 = vmatpush1.bf16.xpose.msra.mxu0 0
    %810 = vmatprep.subr.bf16.mxu0 0
    %811 = vmatpush1.bf16.xpose.msra.mxu0 0
    %812 = vmatprep.subr.bf16.mxu0 0
    %813 = vmatpush1.bf16.xpose.msra.mxu0 0
    %814 = vmatprep.subr.bf16.mxu0 0
    %815 = vmatpush1.bf16.xpose.msra.mxu0 0
    %816 = vmatprep.subr.bf16.mxu0 0
    %817 = vmatpush1.bf16.xpose.msra.mxu0 0
    %818 = vmatprep.subr.bf16.mxu0 0
    %819 = vmatpush1.bf16.xpose.msra.mxu0 0
    %820 = vmatprep.subr.bf16.mxu0 0
    %821 = vmatpush1.bf16.xpose.msra.mxu0 0
    %822 = vmatprep.subr.bf16.mxu0 0
    %823 = vmatpush1.bf16.xpose.msra.mxu0 0
    %824 = vmatprep.subr.bf16.mxu0 0
    %825 = vmatpush1.bf16.xpose.msra.mxu0 0
    %826 = vmatprep.subr.bf16.mxu0 0
    %827 = vmatpush1.bf16.xpose.msra.mxu0 0
    %828 = vmatprep.mubr.bf16.mxu0 0
    %829 = vmatmul.mubr.bf16.gmra.mrb[0].mxu0 %v791
    %v830 = vpop.f32.mrb[0].mxu0
    %v831 = vadd.f32 0.0, %v830
    %v832 = vpop.f32.mrb[0].mxu0
    %v833 = vpop.f32.mrb[0].mxu0
    %v834 = vpop.f32.mrb[0].mxu0
    %835 = vdwg.mxu0
    %v836 = vsel %vm526, %v831, -inf
    %837 = vmax.xlane.f32.xlu0 %v836
    %v838 = vpop.xlane.xlu0 %837
    %v839 = vsub.f32 %v831, %v838
    %v840 = vmul.f32 %v839, 1.442695
    %v841 = vpow.pop %v840
    %v842 = vsel %vm526, %v841, 0.0
    %843 = vadd.xlane.f32.xlu0 %v842
    %v844 = vpop.xlane.xlu0 %843
    %v845 = vrcp.pop %v844
    %v846 = vmul.f32 %v841, %v845
    %v847 = vpack.c.bf16 %v846, %v846
    %v849 = vrot.slane %v485, 4
    %v851 = vsel %vm526, %v847, 0
    %v854 = vsel %vm542, %v849, 0
    %856 = vmatprep.subr.bf16.mxu0 0
    %857 = vmatpush1.bf16.msra.mxu0 %v854
    %858 = vmatprep.subr.bf16.mxu0 0
    %859 = vmatpush1.bf16.msra.mxu0 0
    %860 = vmatprep.subr.bf16.mxu0 0
    %861 = vmatpush1.bf16.msra.mxu0 0
    %862 = vmatprep.subr.bf16.mxu0 0
    %863 = vmatpush1.bf16.msra.mxu0 0
    %864 = vmatprep.subr.bf16.mxu0 0
    %865 = vmatpush1.bf16.msra.mxu0 0
    %866 = vmatprep.subr.bf16.mxu0 0
    %867 = vmatpush1.bf16.msra.mxu0 0
    %868 = vmatprep.subr.bf16.mxu0 0
    %869 = vmatpush1.bf16.msra.mxu0 0
    %870 = vmatprep.subr.bf16.mxu0 0
    %871 = vmatpush1.bf16.msra.mxu0 0
    %872 = vmatprep.subr.bf16.mxu0 0
    %873 = vmatpush1.bf16.msra.mxu0 0
    %874 = vmatprep.subr.bf16.mxu0 0
    %875 = vmatpush1.bf16.msra.mxu0 0
    %876 = vmatprep.subr.bf16.mxu0 0
    %877 = vmatpush1.bf16.msra.mxu0 0
    %878 = vmatprep.subr.bf16.mxu0 0
    %879 = vmatpush1.bf16.msra.mxu0 0
    %880 = vmatprep.subr.bf16.mxu0 0
    %881 = vmatpush1.bf16.msra.mxu0 0
    %882 = vmatprep.subr.bf16.mxu0 0
    %883 = vmatpush1.bf16.msra.mxu0 0
    %884 = vmatprep.subr.bf16.mxu0 0
    %885 = vmatpush1.bf16.msra.mxu0 0
    %886 = vmatprep.subr.bf16.mxu0 0
    %887 = vmatpush1.bf16.msra.mxu0 0
    %888 = vmatprep.mubr.bf16.mxu0 0
    %889 = vmatmul.mubr.bf16.gmra.mrb[0].mxu0 %v851
    %v890 = vpop.f32.mrb[0].mxu0
    %v891 = vadd.f32 0.0, %v890
    %v892 = vpop.f32.mrb[0].mxu0
    %v893 = vpop.f32.mrb[0].mxu0
    %v894 = vpop.f32.mrb[0].mxu0
    %895 = vdwg.mxu0
    %v896 = vpack.c.bf16 %v785, %v581
    %v897 = vpack.c.bf16 %v891, %v679
    %v898 = vld [vmem:[#allocation7] sm:$0xf]
    %v899 = vld [vmem:[#allocation7 + $0x4] sm:$0xf]
    %v900 = vld [vmem:[#allocation7 + $0x8] sm:$0xf]
    %v901 = vld [vmem:[#allocation7 + $0xc] sm:$0xf]
    %v902 = vld [vmem:[#allocation7 + $0x10] sm:$0xf]
    %v903 = vld [vmem:[#allocation7 + $0x14] sm:$0xf]
    %v904 = vld [vmem:[#allocation7 + $0x18] sm:$0xf]
    %v905 = vld [vmem:[#allocation7 + $0x1c] sm:$0xf]
    %v906 = vld [vmem:[#allocation7 + $0x20] sm:$0xf]
    %v907 = vld [vmem:[#allocation7 + $0x24] sm:$0xf]
    %v908 = vld [vmem:[#allocation7 + $0x28] sm:$0xf]
    %v909 = vld [vmem:[#allocation7 + $0x2c] sm:$0xf]
    %v910 = vld [vmem:[#allocation7 + $0x30] sm:$0xf]
    %v911 = vld [vmem:[#allocation7 + $0x34] sm:$0xf]
    %v912 = vld [vmem:[#allocation7 + $0x38] sm:$0xf]
    %v913 = vld [vmem:[#allocation7 + $0x3c] sm:$0xf]
    %v914 = vld [vmem:[#allocation7 + $0x40] sm:$0xf]
    %v915 = vld [vmem:[#allocation7 + $0x44] sm:$0xf]
    %v916 = vld [vmem:[#allocation7 + $0x48] sm:$0xf]
    %v917 = vld [vmem:[#allocation7 + $0x4c] sm:$0xf]
    %v918 = vld [vmem:[#allocation7 + $0x50] sm:$0xf]
    %v919 = vld [vmem:[#allocation7 + $0x54] sm:$0xf]
    %v920 = vld [vmem:[#allocation7 + $0x58] sm:$0xf]
    %v921 = vld [vmem:[#allocation7 + $0x5c] sm:$0xf]
    %v922 = vld [vmem:[#allocation7 + $0x60] sm:$0xf]
    %v923 = vld [vmem:[#allocation7 + $0x64] sm:$0xf]
    %v924 = vld [vmem:[#allocation7 + $0x68] sm:$0xf]
    %v925 = vld [vmem:[#allocation7 + $0x6c] sm:$0xf]
    %v926 = vld [vmem:[#allocation7 + $0x70] sm:$0xf]
    %v927 = vld [vmem:[#allocation7 + $0x74] sm:$0xf]
    %v928 = vld [vmem:[#allocation7 + $0x78] sm:$0xf]
    %v929 = vld [vmem:[#allocation7 + $0x7c] sm:$0xf]
    %v930 = vld [vmem:[%s3] sm:$0x1]
    %v932 = vlaneseq
    %v933 = vshrl.u32 %v932, 7
    %v934 = vsub.s32 0, %v933
    %v935 = vrot.slane %v930, %v934
    %v969 = vunpack.c.l.b16 %v898
    %v970 = vunpack.c.l.b16 %v899
    %v971 = vunpack.c.l.b16 %v900
    %v972 = vunpack.c.l.b16 %v901
    %v973 = vunpack.c.l.b16 %v902
    %v974 = vunpack.c.l.b16 %v903
    %v975 = vunpack.c.l.b16 %v904
    %v976 = vunpack.c.l.b16 %v905
    %v977 = vunpack.c.l.b16 %v906
    %v978 = vunpack.c.l.b16 %v907
    %v979 = vunpack.c.l.b16 %v908
    %v980 = vunpack.c.l.b16 %v909
    %v981 = vunpack.c.l.b16 %v910
    %v982 = vunpack.c.l.b16 %v911
    %v983 = vunpack.c.l.b16 %v912
    %v984 = vunpack.c.l.b16 %v913
    %v985 = vunpack.c.l.b16 %v914
    %v986 = vunpack.c.l.b16 %v915
    %v987 = vunpack.c.l.b16 %v916
    %v988 = vunpack.c.l.b16 %v917
    %v989 = vunpack.c.l.b16 %v918
    %v990 = vunpack.c.l.b16 %v919
    %v991 = vunpack.c.l.b16 %v920
    %v992 = vunpack.c.l.b16 %v921
    %v993 = vunpack.c.l.b16 %v922
    %v994 = vunpack.c.l.b16 %v923
    %v995 = vunpack.c.l.b16 %v924
    %v996 = vunpack.c.l.b16 %v925
    %v997 = vunpack.c.l.b16 %v926
    %v998 = vunpack.c.l.b16 %v927
    %v999 = vunpack.c.l.b16 %v928
    %v1000 = vunpack.c.l.b16 %v929
    %v1001 = vpack.c.b16 %v970, %v969
    %v1002 = vpack.c.b16 %v972, %v971
    %v1003 = vpack.c.b16 %v974, %v973
    %v1004 = vpack.c.b16 %v976, %v975
    %v1005 = vpack.c.b16 %v978, %v977
    %v1006 = vpack.c.b16 %v980, %v979
    %v1007 = vpack.c.b16 %v982, %v981
    %v1008 = vpack.c.b16 %v984, %v983
    %v1009 = vpack.c.b16 %v986, %v985
    %v1010 = vpack.c.b16 %v988, %v987
    %v1011 = vpack.c.b16 %v990, %v989
    %v1012 = vpack.c.b16 %v992, %v991
    %v1013 = vpack.c.b16 %v994, %v993
    %v1014 = vpack.c.b16 %v996, %v995
    %v1015 = vpack.c.b16 %v998, %v997
    %v1016 = vpack.c.b16 %v1000, %v999
    %1033 = vmatprep.subr.bf16.mxu0 0
    %1034 = vmatpush1.bf16.msra.mxu0 %v1001
    %1035 = vmatprep.subr.bf16.mxu0 0
    %1036 = vmatpush1.bf16.msra.mxu0 %v1002
    %1037 = vmatprep.subr.bf16.mxu0 0
    %1038 = vmatpush1.bf16.msra.mxu0 %v1003
    %1039 = vmatprep.subr.bf16.mxu0 0
    %1040 = vmatpush1.bf16.msra.mxu0 %v1004
    %1041 = vmatprep.subr.bf16.mxu0 0
    %1042 = vmatpush1.bf16.msra.mxu0 %v1005
    %1043 = vmatprep.subr.bf16.mxu0 0
    %1044 = vmatpush1.bf16.msra.mxu0 %v1006
    %1045 = vmatprep.subr.bf16.mxu0 0
    %1046 = vmatpush1.bf16.msra.mxu0 %v1007
    %1047 = vmatprep.subr.bf16.mxu0 0
    %1048 = vmatpush1.bf16.msra.mxu0 %v1008
    %1049 = vmatprep.subr.bf16.mxu0 0
    %1050 = vmatpush1.bf16.msra.mxu0 %v1009
    %1051 = vmatprep.subr.bf16.mxu0 0
    %1052 = vmatpush1.bf16.msra.mxu0 %v1010
    %1053 = vmatprep.subr.bf16.mxu0 0
    %1054 = vmatpush1.bf16.msra.mxu0 %v1011
    %1055 = vmatprep.subr.bf16.mxu0 0
    %1056 = vmatpush1.bf16.msra.mxu0 %v1012
    %1057 = vmatprep.subr.bf16.mxu0 0
    %1058 = vmatpush1.bf16.msra.mxu0 %v1013
    %1059 = vmatprep.subr.bf16.mxu0 0
    %1060 = vmatpush1.bf16.msra.mxu0 %v1014
    %1061 = vmatprep.subr.bf16.mxu0 0
    %1062 = vmatpush1.bf16.msra.mxu0 %v1015
    %1063 = vmatprep.subr.bf16.mxu0 0
    %1064 = vmatpush1.bf16.msra.mxu0 %v1016
    %1065 = vmatprep.mubr.bf16.mxu0 %v897
    %1066 = vmatmul.mubr.bf16.gmra.mrb[0].mxu0 %v896
    %v1067 = vpop.f32.mrb[0].mxu0
    %v1068 = vadd.f32 %v935, %v1067
    %v1069 = vpop.f32.mrb[0].mxu0
    %v1070 = vpop.f32.mrb[0].mxu0
    %v1071 = vadd.f32 %v935, %v1070
    %v1072 = vpop.f32.mrb[0].mxu0
    %1073 = vdwg.mxu0
    %1074 = vst [vmem:[#allocation8] sm:$0xff] %v1068
    %1075 = vst [vmem:[#allocation8 + $0x8] sm:$0xff] %v1071
    // Predicated region
    $region30: #{attention_forward.1} parent=1 // pred_check
      _
    $region31: #{attention_forward.1} parent=1 // pred_check_branch
      %1077 = sbr.rel (0) target = $region33
    $region32: #{attention_forward.1} parent=1 // pred_region
      %s1079 = ssub.s32 256, 256
      %1080 = vsyncadd [#allocation4], %s1079
      %s1081 = sshll.u32 [#allocation8], 4
      %s1082 = int_to_ptr.vmem [resolvable:$true] %s1081
      %1087 = dma.vmem_to_hbm [thread:$0]  %s1082, 256, %s4, [#allocation4], 128, 128, 8
    $region33: #{attention_forward.1} parent=1 // pred_fallthru
      _
    // Predicated region
    $region34: #{attention_forward.1} parent=1 // pred_check
      _
    $region35: #{attention_forward.1} parent=1 // pred_check_branch
      %1089 = sbr.rel (0) target = $region37
    $region36: #{attention_forward.1} parent=1 // pred_region
      %1090 = dma.done [#allocation4], 256
    $region37: #{attention_forward.1} parent=1 // pred_fallthru
      _
    %1091 = vsyncpa [#allocation3], 1
    %1092 = vsyncpa [#allocation6], 1
    %1093 = vsyncpa [#allocation4], 1

</llo_original>
